<compile_context>
chip_gen: v5e
topology: v5e:2x2
jax: 0.10.0
libtpu: 0.0.40
codegen_flags: <defaults>
</compile_context>

<pallas_src>
import functools

import numpy as np
import jax
import jax.numpy as jnp
from jax.experimental import pallas as pl
from jax.experimental.pallas import tpu as pltpu

_LANE = 128
_TARGET_TILE_BYTES = 4 * 1024 * 1024    # ~4 MiB input tile per grid step
_MAX_ROW_BYTES = 512 * 1024             # tile the time axis above this per-row size
_VMEM_LIMIT_BYTES = 40 * 1024 * 1024    # safe on v5e/v6e (128 MiB) and v7x (64 MiB)


def _native_sublane(itemsize: int) -> int:
    """Rows per native vreg tile: f32 -> 8, bf16/f16 -> 16, int8/fp8 -> 32."""
    return {4: 8, 2: 16, 1: 32}.get(itemsize, 8)


def _round_up(a: int, b: int) -> int:
    return (a + b - 1) // b * b


def _choose_tiles(B: int, T: int, itemsize: int) -> tuple[int, int]:
    """Pick (TB, TT): lane-dense, dtype-aware, VMEM-friendly tile sizes."""
    sub = _native_sublane(itemsize)
    # Time tile: whole T when a row is small, else a 128-aligned chunk.
    if T * itemsize <= _MAX_ROW_BYTES:
        tt = T                                                   # full dim -> always legal
    else:
        tt = max(_LANE, (_MAX_ROW_BYTES // itemsize) // _LANE * _LANE)
    # Batch tile: fill the ~4 MiB budget with full native-sublane groups.
    tb = max(sub, _TARGET_TILE_BYTES // (tt * itemsize) // sub * sub)
    tb = min(tb, _round_up(B, sub))
    if tb >= B:
        tb = B                                                   # full-dim block, no padded rows
    return tb, tt


def _pre_emphasis_kernel(x_ref, prev_ref, o_ref, *, coef: float):
    """One (TB, TT) tile:  y[:, t] = x[:, t] - coef * prev[:, t]."""
    x = x_ref[...].astype(jnp.float32)                           # (TB, TT), f32 compute
    # prev[:, t] = x[:, t-1]  (XLU lane rotate; wrapped-around column 0 is replaced below)
    prev = pltpu.roll(x, shift=1, axis=1)
    col0 = jax.lax.broadcasted_iota(jnp.int32, x.shape, 1) == 0
    # Column 0 comes from the precomputed boundary column (reflect pad for the
    # first time tile, last sample of the previous tile otherwise).
    prev = jnp.where(col0, prev_ref[...].astype(jnp.float32), prev)
    # Single unmasked, lane-dense full-tile store.
    o_ref[...] = (x - jnp.float32(coef) * prev).astype(o_ref.dtype)


def pre_emphasis(x: jax.Array, coef: float = 0.97, *,
                 block_b: int | None = None, block_t: int | None = None) -> jax.Array:
    """Pallas equivalent of PreEmphasis.forward. Returns shape (B, 1, T)."""
    assert x.ndim in (2, 3)
    if x.ndim == 3:
        assert x.shape[1] == 1, "conv1d filter has in_channels=1"
        x2 = x.reshape(x.shape[0], x.shape[2])
    else:
        x2 = x
    B, T = x2.shape
    assert T >= 2, "reflect pad of width 1 requires T >= 2"

    itemsize = jnp.dtype(x2.dtype).itemsize
    tb, tt = _choose_tiles(B, T, itemsize)
    if block_b is not None:
        tb = block_b
    if block_t is not None:
        tt = block_t
    nb, nt = pl.cdiv(B, tb), pl.cdiv(T, tt)

    # Boundary sample for each time tile (removes the sequential carry so both
    # grid axes can be "parallel"):
    #   tile 0   -> reflect pad value  x[:, 1]
    #   tile j>0 -> last sample of the previous tile  x[:, j*tt - 1]
    # Shaped (nt, B, 1) so its (tb, 1) block keeps a legal (sublane, lane) layout.
    idx = np.arange(nt) * tt - 1
    idx[0] = 1
    prev_cols = jnp.transpose(x2[:, idx])[:, :, None]            # (nt, B, 1), few KB

    out = pl.pallas_call(
        functools.partial(_pre_emphasis_kernel, coef=float(coef)),
        out_shape=jax.ShapeDtypeStruct((B, 1, T), x2.dtype),     # conv1d NCW output
        grid=(nb, nt),
        in_specs=[
            pl.BlockSpec((tb, tt), lambda i, j: (i, j)),          # main (TB, TT) tile
            pl.BlockSpec((None, tb, 1), lambda i, j: (j, i, 0)),  # boundary column
        ],
        # Emit (B, 1, T) directly; the size-1 channel dim is squeezed in-kernel,
        # so the store stays lane-dense and no post-kernel reshape is needed.
        out_specs=pl.BlockSpec((tb, None, tt), lambda i, j: (i, 0, j)),
        compiler_params=pltpu.CompilerParams(
            # No cross-tile dependence remains -> both axes parallel (megacore /
            # v7x dual-TC sharding, even when there is only a single batch tile).
            dimension_semantics=("parallel", "parallel"),
            vmem_limit_bytes=_VMEM_LIMIT_BYTES,
        ),
        # Purely HBM-bandwidth-bound elementwise op: tell XLA it is cheap.
        cost_estimate=pl.CostEstimate(
            flops=2 * B * T,
            transcendentals=0,
            bytes_accessed=(2 * B * T + B * nt) * itemsize,
        ),
    )(x2, prev_cols)
    return out


def _reference(x: jax.Array, coef: float = 0.97) -> jax.Array:
    """Plain-JAX reference mirroring the PyTorch forward (reflect pad + conv1d)."""
    if x.ndim == 2:
        x = x[:, None, :]
    x_pad = jnp.concatenate([x[:, :, 1:2], x], axis=-1)          # reflect pad (1, 0)
    return -coef * x_pad[:, :, :-1] + 1.0 * x_pad[:, :, 1:]      # filter [-coef, 1.0]


if __name__ == "__main__":
    key = jax.random.PRNGKey(0)
    k1, k2, k3 = jax.random.split(key, 3)

    # 2-D input (batch, time): single-tile path.
    B, T = 4, 256
    x2d = jax.random.normal(k1, (B, T), dtype=jnp.float32)
    y2d = jax.block_until_ready(pre_emphasis(x2d))
    assert y2d.shape == (B, 1, T), y2d.shape
    assert jnp.allclose(y2d, _reference(x2d), atol=1e-5, rtol=1e-5)

    # 3-D input (batch, 1, time), as the PyTorch module consumes after unsqueeze.
    x3d = x2d[:, None, :]
    y3d = jax.block_until_ready(pre_emphasis(x3d))
    assert y3d.shape == (B, 1, T), y3d.shape
    assert jnp.allclose(y3d, _reference(x3d), atol=1e-5, rtol=1e-5)

    # Multi-tile path: both grid axes > 1, exercises the per-tile boundary column.
    B2, T2 = 16, 512
    xb = jax.random.normal(k2, (B2, T2), dtype=jnp.float32)
    yb = jax.block_until_ready(pre_emphasis(xb, block_b=8, block_t=128))
    assert yb.shape == (B2, 1, T2), yb.shape
    assert jnp.allclose(yb, _reference(xb), atol=1e-5, rtol=1e-5)

    # bf16 path: dtype-aware sublane tiling, f32 compute, bf16 store.
    xbf = jax.random.normal(k3, (16, 256), dtype=jnp.float32).astype(jnp.bfloat16)
    ybf = jax.block_until_ready(pre_emphasis(xbf))
    assert ybf.shape == (16, 1, 256), ybf.shape
    assert jnp.allclose(ybf.astype(jnp.float32),
                        _reference(xbf).astype(jnp.float32), atol=1e-1, rtol=1e-1)

    print("KERNEL_OK")
</pallas_src>

<mosaic_0001>
module attributes {stable_mosaic.version = 11 : i64} {
  func.func @_pre_emphasis_kernel(%arg0: i32, %arg1: i32, %arg2: memref<4x256xf32, #tpu.memory_space<vmem>>, %arg3: memref<1x4x1xf32, #tpu.memory_space<vmem>>, %arg4: memref<4x1x256xf32, #tpu.memory_space<vmem>>) attributes {dimension_semantics = [#tpu.dimension_semantics<parallel>, #tpu.dimension_semantics<parallel>], iteration_bounds = array<i64: 1, 1>, scalar_prefetch = 0 : i64, scratch_operands = 0 : i64, tpu.core_type = #tpu.core_type<tc>, window_params = [{transform_indices = @transform_0, window_bounds = array<i64: 4, 256>}, {transform_indices = @transform_1, window_bounds = array<i64: 1, 4, 1>}, {transform_indices = @transform_2, window_bounds = array<i64: 4, 1, 256>}]} {
    %c0 = arith.constant 0 : index
    %c0_0 = arith.constant 0 : index
    %0 = vector.load %arg2[%c0, %c0_0] : memref<4x256xf32, #tpu.memory_space<vmem>>, vector<4x256xf32>
    %c1_i32 = arith.constant 1 : i32
    %1 = tpu.dynamic_rotate %0 by %c1_i32 dim 1 : vector<4x256xf32>, i32 -> vector<4x256xf32>
    %2 = tpu.iota {dimensions = array<i32: 1>} : vector<4x256xi32>
    %c0_i32 = arith.constant 0 : i32
    %3 = vector.broadcast %c0_i32 : i32 to vector<4x256xi32>
    %4 = arith.cmpi eq, %2, %3 : vector<4x256xi32>
    %c0_1 = arith.constant 0 : index
    %c0_2 = arith.constant 0 : index
    %c0_3 = arith.constant 0 : index
    %5 = vector.load %arg3[%c0_1, %c0_2, %c0_3] : memref<1x4x1xf32, #tpu.memory_space<vmem>>, vector<1x4x1xf32>
    %6 = vector.shape_cast %5 : vector<1x4x1xf32> to vector<4x1xf32>
    %7 = vector.shape_cast %6 : vector<4x1xf32> to vector<4x1xf32>
    %8 = vector.broadcast %7 : vector<4x1xf32> to vector<4x256xf32>
    %9 = arith.select %4, %8, %1 : vector<4x256xi1>, vector<4x256xf32>
    %cst = arith.constant 9.700000e-01 : f32
    %10 = vector.broadcast %cst : f32 to vector<4x256xf32>
    %11 = arith.mulf %10, %9 : vector<4x256xf32>
    %12 = arith.subf %0, %11 : vector<4x256xf32>
    %c0_4 = arith.constant 0 : index
    %c0_5 = arith.constant 0 : index
    %c0_6 = arith.constant 0 : index
    %13 = vector.load %arg4[%c0_4, %c0_5, %c0_6] : memref<4x1x256xf32, #tpu.memory_space<vmem>>, vector<4x1x256xf32>
    %14 = vector.shape_cast %13 : vector<4x1x256xf32> to vector<4x256xf32>
    %15 = vector.shape_cast %12 : vector<4x256xf32> to vector<4x1x256xf32>
    tpu.vector_store %arg4[%c0_4, %c0_5, %c0_6], %15 {strides = array<i32>} : memref<4x1x256xf32, #tpu.memory_space<vmem>>, vector<4x1x256xf32>,
    return
  }
  func.func @transform_0(%arg0: i32, %arg1: i32) -> (i32, i32) {
    %c0_i32 = arith.constant 0 : i32
    return %arg0, %arg1 : i32, i32
  }
  func.func @transform_1(%arg0: i32, %arg1: i32) -> (i32, i32, i32) {
    %c0_i32 = arith.constant 0 : i32
    %c0_i32_0 = arith.constant 0 : i32
    return %arg1, %arg0, %c0_i32 : i32, i32, i32
  }
  func.func @transform_2(%arg0: i32, %arg1: i32) -> (i32, i32, i32) {
    %c0_i32 = arith.constant 0 : i32
    %c0_i32_0 = arith.constant 0 : i32
    return %arg0, %c0_i32, %arg1 : i32, i32, i32
  }
}

</mosaic_0001>

<llo_original>
// kernel: tpu_custom_call.1
$region0: #{tpu_custom_call.1}
  #allocation0 [shape = 'u32[]', space=smem, size = 0x4, offset = 0x4, fixed_abs, tag = 'smem constant byte address 0x4 - core index']
  #allocation1 [shape = 'u32[72,128]{1,0:T(1,128)}', space=vmem, size = 0x9000, scoped, tag = 'internal scratch']
  %s0 = inlined_call_operand.hbm [shape: f32[4,256], index: 0, kind: input, shape index: {}]
  %s1 = inlined_call_operand.vmem [shape: f32[1,4,1], index: 1, kind: input, shape index: {}]
  %s2 = inlined_call_operand.hbm [shape: f32[4,1,256], index: 2, kind: output, shape index: {}]
  %s3 = sld [smem:[#allocation0]]
  $region22: #{tpu_custom_call.1} parent=0
    _
  %s5 = ssub.s32 1, %s3
  %s6 = scalar_select 0, %s5, %s3
  $region1: #{tpu_custom_call.1} parent=0
    #allocation2 [shape = 'u8[4096]{0}', space=vmem, size = 0x1000, scoped, tag = 'input window, operand 0, single buffered']
    #allocation3 [shape = 's32[1]{0}', space=sflag, size = 0x4, scoped, tag = 'scoped memory for tpu_custom_call.1']
    #allocation4 [shape = 's32[1]{0}', space=sflag, size = 0x4, scoped, tag = 'scoped memory for tpu_custom_call.1']
    #allocation5 [shape = 'u8[4096]{0}', space=vmem, size = 0x1000, scoped, tag = 'output window, operand 0, single buffered']
    %7 = vsyncpa [#allocation3], 0
    %8 = vsyncpa [#allocation4], 0
    // Predicated region
    $region2: #{tpu_custom_call.1} parent=1 // pred_check
      _
    $region3: #{tpu_custom_call.1} parent=1 // pred_check_branch
      %10 = sbr.rel (0) target = $region5
    $region4: #{tpu_custom_call.1} parent=1 // pred_region
      %12 = vsyncadd [#allocation3], 0
      %s14 = sshll.u32 %s0, 4
      %s15 = int_to_ptr.hbm [resolvable:$true] %s14
      %s16 = sshll.u32 [#allocation2], 4
      %s17 = int_to_ptr.vmem [resolvable:$true] %s16
      %19 = dma.hbm_to_vmem [thread:$0]  %s15, 128, %s17, [#allocation3]
    $region5: #{tpu_custom_call.1} parent=1 // pred_fallthru
      _
    // Predicated region
    $region6: #{tpu_custom_call.1} parent=1 // pred_check
      _
    $region7: #{tpu_custom_call.1} parent=1 // pred_check_branch
      %21 = sbr.rel (0) target = $region9
    $region8: #{tpu_custom_call.1} parent=1 // pred_region
      _
    $region9: #{tpu_custom_call.1} parent=1 // pred_fallthru
      _
    // Predicated region
    $region10: #{tpu_custom_call.1} parent=1 // pred_check
      _
    $region11: #{tpu_custom_call.1} parent=1 // pred_check_branch
      %23 = sbr.rel (0) target = $region13
    $region12: #{tpu_custom_call.1} parent=1 // pred_region
      %25 = dma.done [#allocation3], 128
    $region13: #{tpu_custom_call.1} parent=1 // pred_fallthru
      _
    %v26 = vld [vmem:[#allocation2] sm:$0xff]
    %28 = vst [vmem:[#allocation1] ss:$2 sm:$0xff] %v26
    %v29 = vld.sshfl [vmem:[#allocation1] sm:$0xff pattern:$0x75316420]
    %v30 = vld.sshfl [vmem:[#allocation1 + $0x8] sm:$0xff pattern:$0x75316420]
    %33 = vrot.lane.b32.xlu0 %v29, 1
    %v34 = vpop.permute.xlu0 %33
    %35 = vrot.lane.b32.xlu0 %v30, 1
    %v36 = vpop.permute.xlu0 %35
    %v37 = vlaneseq
    %v38 = vand.u32 %v37, 127
    %vm39 = vcmp.lt.s32.totalorder %v38, 1
    %v40 = vsel %vm39, %v34, %v36
    %v41 = vsel %vm39, %v36, %v34
    %v42 = vadd.s32 %v38, 128
    %vm43 = vcmp.eq.s32.totalorder %v38, 0
    %vm44 = vcmp.eq.s32.totalorder %v42, 0
    %v45 = vld [vmem:[%s1] sm:$0xf]
    %47 = vset.pattern.permute.xlu0 0
    %48 = vperm.xlu0 %47, %v45
    %v49 = vpop.permute.xlu0 %48
    %v51 = vsel %vm43, %v49, %v41
    %v52 = vsel %vm44, %v49, %v40
    %v53 = vmul.f32 %v51, 0.97
    %v54 = vmul.f32 %v52, 0.97
    %v57 = vrot.slane %v54, 4
    %vm58 = vcmask 1043456
    %v59 = vsel %vm58, %v53, %v57
    %v61 = vsub.f32 %v26, %v59
    %v63 = vrot.slane %v61, 3
    %vm64 = vcmask 1040384
    %v65 = vsel %vm64, %v61, %v63
    %vm66 = vcmask 1041409
    %v67 = vsel %vm66, %v61, %v63
    %v68 = vrot.slane %v67, 1
    %vm69 = vcmask 1042434
    %v70 = vsel %vm69, %v61, %v63
    %v71 = vrot.slane %v70, 2
    %vm72 = vcmask 1043459
    %v73 = vsel %vm72, %v61, %v63
    %v74 = vrot.slane %v73, 3
    %v79 = vlaneseq
    %vm80 = vcmp.ge.s32.totalorder %v79, 0
    %vm81 = vcmp.lt.s32.totalorder %v79, 256
    %vm82 = vmand %vm80, %vm81
    %83 = vst.msk [vmem:[#allocation5] sm:$0x3] %vm82, %v65
    %84 = vst.msk [vmem:[#allocation5 + $0x2] sm:$0x3] %vm82, %v68
    %85 = vst.msk [vmem:[#allocation5 + $0x4] sm:$0x3] %vm82, %v71
    %86 = vst.msk [vmem:[#allocation5 + $0x6] sm:$0x3] %vm82, %v74
    // Predicated region
    $region14: #{tpu_custom_call.1} parent=1 // pred_check
      _
    $region15: #{tpu_custom_call.1} parent=1 // pred_check_branch
      %88 = sbr.rel (0) target = $region17
    $region16: #{tpu_custom_call.1} parent=1 // pred_region
      %90 = vsyncadd [#allocation4], 0
      %s91 = sshll.u32 [#allocation5], 4
      %s92 = int_to_ptr.vmem [resolvable:$true] %s91
      %s93 = sshll.u32 %s2, 4
      %s94 = int_to_ptr.hbm [resolvable:$true] %s93
      %99 = dma.vmem_to_hbm [thread:$0]  %s92, 128, %s94, [#allocation4], 32, 32, 2
    $region17: #{tpu_custom_call.1} parent=1 // pred_fallthru
      _
    // Predicated region
    $region18: #{tpu_custom_call.1} parent=1 // pred_check
      _
    $region19: #{tpu_custom_call.1} parent=1 // pred_check_branch
      %101 = sbr.rel (0) target = $region21
    $region20: #{tpu_custom_call.1} parent=1 // pred_region
      %103 = dma.done [#allocation4], 128
    $region21: #{tpu_custom_call.1} parent=1 // pred_fallthru
      _
    %104 = vsyncpa [#allocation3], 1
    %105 = vsyncpa [#allocation4], 1

</llo_original>
